<compile_context>
chip_gen: v5e
topology: v5e:2x2
jax: 0.10.0
libtpu: 0.0.40
codegen_flags: <defaults>
</compile_context>

<pallas_src>
import functools

import jax
import jax.numpy as jnp
from jax import lax
from jax.experimental import pallas as pl
from jax.experimental.pallas import tpu as pltpu


# ----------------------------------------------------------------------------
# Pallas kernel: fused bidirectional LSTM recurrence + FC + softmax.
# ----------------------------------------------------------------------------
def _bilstm_fc_softmax_kernel(x_ref, wih_ref, whh_ref, b_ref, wfc_ref, bfc_ref,
                              out_ref):
    # x_ref   : (S*Bp, E)  time-major embeddings, batch padded to Bp (mult. of 8)
    # wih_ref : (E, 8H)    gate-interleaved [i_f i_b f_f f_b g_f g_b o_f o_b]
    # whh_ref : (2H, 8H)   block-diagonal (h_f rows -> *_f cols, h_b rows -> *_b cols)
    # b_ref   : (1, 8H)    b_ih + b_hh, interleaved
    # wfc_ref : (2H, Cp)   fc weight^T, zero-padded to Cp lanes
    # bfc_ref : (1, Cp)    fc bias, padded classes = -1e30 (softmax ignores them)
    # out_ref : (Bp, Cp)   softmax probabilities (padded rows/lanes discarded)
    Bp = out_ref.shape[0]
    S = x_ref.shape[0] // Bp
    H2 = whh_ref.shape[0]          # 2H  ([fwd | bwd])
    H = H2 // 2
    G = 4 * H2                     # 8H

    # ---- Hoisted input projection for both directions: one big MXU matmul. ----
    xg = jnp.dot(x_ref[...], wih_ref[...],
                 preferred_element_type=jnp.float32) + b_ref[...]      # (S*Bp, 8H)

    whh = whh_ref[...]

    # Hoisted lane mask: inside each 2H gate block, first H lanes = forward dir.
    lane = lax.broadcasted_iota(jnp.int32, (Bp, G), 1)
    fwd_mask = (lane % H2) < H

    h = jnp.zeros((Bp, H2), jnp.float32)   # [h_fwd | h_bwd]
    c = jnp.zeros((Bp, H2), jnp.float32)

    # Fully unrolled fused recurrence: fwd consumes step t, bwd consumes S-1-t.
    for t in range(S):
        x_f = xg[t * Bp:(t + 1) * Bp, :]             # static, sublane-aligned
        x_b = xg[(S - 1 - t) * Bp:(S - t) * Bp, :]
        xg_t = jnp.where(fwd_mask, x_f, x_b)         # (Bp, 8H)

        gates = xg_t + jnp.dot(h, whh, preferred_element_type=jnp.float32)
        sig = jax.nn.sigmoid(gates)                  # full lane-dense tile (EUP)
        th = jnp.tanh(gates)

        i = sig[:, 0 * H2:1 * H2]
        f = sig[:, 1 * H2:2 * H2]
        g = th[:, 2 * H2:3 * H2]
        o = sig[:, 3 * H2:4 * H2]
        c = f * c + i * g
        h = o * jnp.tanh(c)

    # h == cat(h_fwd_final, h_bwd_final, dim=1) == cat(h[0], h[1], dim=1)
    logits = jnp.dot(h, wfc_ref[...],
                     preferred_element_type=jnp.float32) + bfc_ref[...]
    m = jnp.max(logits, axis=1, keepdims=True)
    e = jnp.exp(logits - m)
    denom = jnp.sum(e, axis=1, keepdims=True)
    out_ref[...] = e * pl.reciprocal(denom, approx=True)


def bilstm_fc_softmax(embedded_sbe, kp, *, num_classes):
    """embedded_sbe: (S, B, E) float32; kp: kernel-layout params (see below)."""
    S, B, E = embedded_sbe.shape
    Cp = kp["wfc"].shape[1]

    # Pad batch to a sublane multiple; classes already padded to 128 lanes.
    Bp = max(8, ((B + 7) // 8) * 8)
    x = jnp.zeros((S, Bp, E), jnp.float32).at[:, :B, :].set(embedded_sbe)
    x = x.reshape(S * Bp, E)

    vmem = functools.partial(pl.BlockSpec, memory_space=pltpu.MemorySpace.VMEM)
    args = (x, kp["wih"], kp["whh"], kp["b"], kp["wfc"], kp["bfc"])
    out = pl.pallas_call(
        _bilstm_fc_softmax_kernel,
        out_shape=jax.ShapeDtypeStruct((Bp, Cp), jnp.float32),
        in_specs=[vmem() for _ in args],
        out_specs=vmem(),
    )(*args)
    return out[:B, :num_classes]


# ----------------------------------------------------------------------------
# Parameter construction ("PyTorch-shaped"), kernel-layout packing, BERT stand-in.
# ----------------------------------------------------------------------------
def make_params(key, *, vocab, seq_len, embed, hidden, num_classes):
    ks = jax.random.split(key, 12)
    s = 0.1

    def rnd(k, shape):
        return (s * jax.random.normal(k, shape)).astype(jnp.float32)

    # Embedding stand-in for the pretrained BERT encoder.
    word_emb = rnd(ks[0], (vocab, embed))
    pos_emb = rnd(ks[1], (seq_len, embed))

    # PyTorch LSTM layer-0 shapes: W_ih (4H, E), W_hh (4H, H), biases (4H,).
    tp = dict(
        wih_f=rnd(ks[2], (4 * hidden, embed)),
        whh_f=rnd(ks[3], (4 * hidden, hidden)),
        bih_f=rnd(ks[4], (4 * hidden,)),
        bhh_f=rnd(ks[5], (4 * hidden,)),
        wih_b=rnd(ks[6], (4 * hidden, embed)),
        whh_b=rnd(ks[7], (4 * hidden, hidden)),
        bih_b=rnd(ks[8], (4 * hidden,)),
        bhh_b=rnd(ks[9], (4 * hidden,)),
        # fc: Linear(2H -> C): weight (C, 2H), bias (C,)
        wfc=rnd(ks[10], (num_classes, 2 * hidden)),
        bfc=rnd(ks[11], (num_classes,)),
    )
    return word_emb, pos_emb, tp


def to_kernel_params(tp, *, hidden, num_classes):
    """Repack PyTorch-shaped params into the fused / interleaved kernel layout."""
    H = hidden
    C = num_classes
    Cp = max(128, ((C + 127) // 128) * 128)

    def interleave(wf, wb):
        # wf, wb: (rows, 4H) with column order [i, f, g, o] (PyTorch gate order).
        cols = []
        for k in range(4):
            cols.append(wf[:, k * H:(k + 1) * H])
            cols.append(wb[:, k * H:(k + 1) * H])
        return jnp.concatenate(cols, axis=1)   # (rows, 8H): [i_f i_b f_f f_b ...]

    wih = interleave(tp["wih_f"].T, tp["wih_b"].T)                       # (E, 8H)
    z = jnp.zeros((H, 4 * H), jnp.float32)
    whh = interleave(jnp.concatenate([tp["whh_f"].T, z], axis=0),
                     jnp.concatenate([z, tp["whh_b"].T], axis=0))        # (2H, 8H)
    b = interleave((tp["bih_f"] + tp["bhh_f"])[None, :],
                   (tp["bih_b"] + tp["bhh_b"])[None, :])                 # (1, 8H)

    wfc = jnp.zeros((2 * H, Cp), jnp.float32).at[:, :C].set(tp["wfc"].T)
    bfc = jnp.full((1, Cp), -1e30, jnp.float32).at[0, :C].set(tp["bfc"])
    return dict(wih=wih, whh=whh, b=b, wfc=wfc, bfc=bfc)


def bert_standin(word_emb, pos_emb, ids, mask):
    # TODO(synk): pretrained BertModel encoder has no in-script equivalent;
    # replaced by a deterministic (word + position) embedding lookup, masked.
    emb = word_emb[ids] + pos_emb[None, :, :]          # (B, S, E)
    return emb * mask[:, :, None].astype(emb.dtype)


def sentiment_classifier_forward(batch, word_emb, pos_emb, kernel_params,
                                 num_classes):
    embedded = bert_standin(word_emb, pos_emb, batch["context_idxs"],
                            batch["context_mask"])           # (B, S, E)
    embedded_sbe = jnp.transpose(embedded, (1, 0, 2))         # (S, B, E) time-major
    return bilstm_fc_softmax(embedded_sbe, kernel_params,
                             num_classes=num_classes)         # (B, C)


# ----------------------------------------------------------------------------
# Pure-JAX reference (same math, natural layout) for a correctness check.
# ----------------------------------------------------------------------------
def reference_forward(batch, word_emb, pos_emb, tp):
    x = bert_standin(word_emb, pos_emb, batch["context_idxs"],
                     batch["context_mask"])   # (B, S, E)
    B, S, _ = x.shape
    H = tp["whh_f"].shape[1]

    def run_dir(seq, wih, whh, bih, bhh):
        h = jnp.zeros((B, H), jnp.float32)
        c = jnp.zeros((B, H), jnp.float32)
        for t in range(S):
            g = seq[:, t, :] @ wih.T + h @ whh.T + bih + bhh
            i = jax.nn.sigmoid(g[:, 0 * H:1 * H])
            f = jax.nn.sigmoid(g[:, 1 * H:2 * H])
            gg = jnp.tanh(g[:, 2 * H:3 * H])
            o = jax.nn.sigmoid(g[:, 3 * H:4 * H])
            c = f * c + i * gg
            h = o * jnp.tanh(c)
        return h

    h_f = run_dir(x, tp["wih_f"], tp["whh_f"], tp["bih_f"], tp["bhh_f"])
    h_b = run_dir(x[:, ::-1, :], tp["wih_b"], tp["whh_b"], tp["bih_b"], tp["bhh_b"])
    logits = jnp.concatenate([h_f, h_b], axis=1) @ tp["wfc"].T + tp["bfc"]
    return jax.nn.softmax(logits, axis=1)


if __name__ == "__main__":
    B, S = 2, 8           # batch, sequence length
    E, H, C = 32, 16, 3   # bert hidden (embedding_size), lstm hidden, num_classes
    VOCAB = 50

    key = jax.random.PRNGKey(0)
    k_param, k_ids = jax.random.split(key)

    word_emb, pos_emb, torch_params = make_params(
        k_param, vocab=VOCAB, seq_len=S, embed=E, hidden=H, num_classes=C)
    kernel_params = to_kernel_params(torch_params, hidden=H, num_classes=C)

    ids = jax.random.randint(k_ids, (B, S), 0, VOCAB, dtype=jnp.int32)
    mask = jnp.ones((B, S), dtype=jnp.int32).at[1, S - 2:].set(0)
    batch = {"context_idxs": ids, "context_mask": mask}

    out = sentiment_classifier_forward(batch, word_emb, pos_emb, kernel_params, C)
    out = jax.block_until_ready(out)

    ref = reference_forward(batch, word_emb, pos_emb, torch_params)
    assert out.shape == (B, C)
    # approx=True reciprocal -> rows sum to 1 within EUP rcp accuracy.
    assert jnp.allclose(jnp.sum(out, axis=1), 1.0, atol=2e-3)
    assert jnp.allclose(out, ref, atol=2e-2, rtol=2e-2)

    print("KERNEL_OK")
</pallas_src>

<mosaic_0001>
module attributes {stable_mosaic.version = 11 : i64} {
  func.func @_bilstm_fc_softmax_kernel(%arg0: memref<64x32xf32, #tpu.memory_space<vmem>>, %arg1: memref<32x128xf32, #tpu.memory_space<vmem>>, %arg2: memref<32x128xf32, #tpu.memory_space<vmem>>, %arg3: memref<1x128xf32, #tpu.memory_space<vmem>>, %arg4: memref<32x128xf32, #tpu.memory_space<vmem>>, %arg5: memref<1x128xf32, #tpu.memory_space<vmem>>, %arg6: memref<8x128xf32, #tpu.memory_space<vmem>>) attributes {dimension_semantics = [], scalar_prefetch = 0 : i64, scratch_operands = 0 : i64, tpu.core_type = #tpu.core_type<tc>} {
    %c0 = arith.constant 0 : index
    %c0_0 = arith.constant 0 : index
    %0 = vector.load %arg0[%c0, %c0_0] : memref<64x32xf32, #tpu.memory_space<vmem>>, vector<64x32xf32>
    %c0_1 = arith.constant 0 : index
    %c0_2 = arith.constant 0 : index
    %1 = vector.load %arg1[%c0_1, %c0_2] : memref<32x128xf32, #tpu.memory_space<vmem>>, vector<32x128xf32>
    %cst = arith.constant dense<0.000000e+00> : vector<64x128xf32>
    %2 = tpu.matmul %0, %1, %cst {dimension_numbers = #tpu.dot_dimension_numbers<[1], [0], [0], [1], [0, 0, 1, 1], [], []>} : vector<64x32xf32>, vector<32x128xf32>, vector<64x128xf32> -> vector<64x128xf32>
    %c0_3 = arith.constant 0 : index
    %c0_4 = arith.constant 0 : index
    %3 = vector.load %arg3[%c0_3, %c0_4] : memref<1x128xf32, #tpu.memory_space<vmem>>, vector<1x128xf32>
    %4 = vector.broadcast %3 : vector<1x128xf32> to vector<64x128xf32>
    %5 = arith.addf %2, %4 : vector<64x128xf32>
    %c0_5 = arith.constant 0 : index
    %c0_6 = arith.constant 0 : index
    %6 = vector.load %arg2[%c0_5, %c0_6] : memref<32x128xf32, #tpu.memory_space<vmem>>, vector<32x128xf32>
    %7 = tpu.iota {dimensions = array<i32: 1>} : vector<8x128xi32>
    %c32_i32 = arith.constant 32 : i32
    %c0_i32 = arith.constant 0 : i32
    %8 = arith.cmpi eq, %c32_i32, %c0_i32 : i32
    %c1_i32 = arith.constant 1 : i32
    %9 = arith.select %8, %c1_i32, %c32_i32 : i32
    %10 = vector.broadcast %9 : i32 to vector<8x128xi32>
    %11 = arith.remsi %7, %10 : vector<8x128xi32>
    %c0_i32_7 = arith.constant 0 : i32
    %12 = vector.broadcast %c0_i32_7 : i32 to vector<8x128xi32>
    %13 = arith.cmpi ne, %11, %12 : vector<8x128xi32>
    %c0_i32_8 = arith.constant 0 : i32
    %14 = vector.broadcast %c0_i32_8 : i32 to vector<8x128xi32>
    %15 = arith.cmpi slt, %11, %14 : vector<8x128xi32>
    %c0_i32_9 = arith.constant 0 : i32
    %16 = arith.cmpi slt, %9, %c0_i32_9 : i32
    %17 = vector.broadcast %16 : i1 to vector<8x128xi1>
    %18 = vector.broadcast %17 : vector<8x128xi1> to vector<8x128xi1>
    %19 = arith.xori %15, %18 : vector<8x128xi1>
    %20 = arith.andi %19, %13 : vector<8x128xi1>
    %21 = vector.broadcast %9 : i32 to vector<8x128xi32>
    %22 = arith.addi %11, %21 : vector<8x128xi32>
    %23 = arith.select %20, %22, %11 : vector<8x128xi1>, vector<8x128xi32>
    %c16_i32 = arith.constant 16 : i32
    %24 = vector.broadcast %c16_i32 : i32 to vector<8x128xi32>
    %25 = arith.cmpi slt, %23, %24 : vector<8x128xi32>
    %cst_10 = arith.constant 0.000000e+00 : f32
    %26 = vector.broadcast %cst_10 : f32 to vector<8x32xf32>
    %cst_11 = arith.constant 0.000000e+00 : f32
    %27 = vector.broadcast %cst_11 : f32 to vector<8x32xf32>
    %28 = vector.extract_strided_slice %5 {offsets = [0, 0], sizes = [8, 128], strides = [1, 1]} : vector<64x128xf32> to vector<8x128xf32>
    %29 = vector.extract_strided_slice %5 {offsets = [56, 0], sizes = [8, 128], strides = [1, 1]} : vector<64x128xf32> to vector<8x128xf32>
    %30 = arith.select %25, %28, %29 : vector<8x128xi1>, vector<8x128xf32>
    %cst_12 = arith.constant dense<0.000000e+00> : vector<8x128xf32>
    %31 = tpu.matmul %26, %6, %cst_12 {dimension_numbers = #tpu.dot_dimension_numbers<[1], [0], [0], [1], [0, 0, 1, 1], [], []>} : vector<8x32xf32>, vector<32x128xf32>, vector<8x128xf32> -> vector<8x128xf32>
    %32 = arith.addf %30, %31 : vector<8x128xf32>
    %33 = arith.negf %32 : vector<8x128xf32>
    %34 = math.exp %33 : vector<8x128xf32>
    %cst_13 = arith.constant 1.000000e+00 : f32
    %35 = vector.broadcast %cst_13 : f32 to vector<8x128xf32>
    %36 = arith.addf %35, %34 : vector<8x128xf32>
    %37 = arith.divf %35, %36 : vector<8x128xf32>
    %38 = math.tanh %32 : vector<8x128xf32>
    %39 = vector.extract_strided_slice %37 {offsets = [0, 0], sizes = [8, 32], strides = [1, 1]} : vector<8x128xf32> to vector<8x32xf32>
    %40 = vector.extract_strided_slice %37 {offsets = [0, 32], sizes = [8, 32], strides = [1, 1]} : vector<8x128xf32> to vector<8x32xf32>
    %41 = vector.extract_strided_slice %38 {offsets = [0, 64], sizes = [8, 32], strides = [1, 1]} : vector<8x128xf32> to vector<8x32xf32>
    %42 = vector.extract_strided_slice %37 {offsets = [0, 96], sizes = [8, 32], strides = [1, 1]} : vector<8x128xf32> to vector<8x32xf32>
    %43 = arith.mulf %40, %27 : vector<8x32xf32>
    %44 = arith.mulf %39, %41 : vector<8x32xf32>
    %45 = arith.addf %43, %44 : vector<8x32xf32>
    %46 = math.tanh %45 : vector<8x32xf32>
    %47 = arith.mulf %42, %46 : vector<8x32xf32>
    %48 = vector.extract_strided_slice %5 {offsets = [8, 0], sizes = [8, 128], strides = [1, 1]} : vector<64x128xf32> to vector<8x128xf32>
    %49 = vector.extract_strided_slice %5 {offsets = [48, 0], sizes = [8, 128], strides = [1, 1]} : vector<64x128xf32> to vector<8x128xf32>
    %50 = arith.select %25, %48, %49 : vector<8x128xi1>, vector<8x128xf32>
    %cst_14 = arith.constant dense<0.000000e+00> : vector<8x128xf32>
    %51 = tpu.matmul %47, %6, %cst_14 {dimension_numbers = #tpu.dot_dimension_numbers<[1], [0], [0], [1], [0, 0, 1, 1], [], []>} : vector<8x32xf32>, vector<32x128xf32>, vector<8x128xf32> -> vector<8x128xf32>
    %52 = arith.addf %50, %51 : vector<8x128xf32>
    %53 = arith.negf %52 : vector<8x128xf32>
    %54 = math.exp %53 : vector<8x128xf32>
    %cst_15 = arith.constant 1.000000e+00 : f32
    %55 = vector.broadcast %cst_15 : f32 to vector<8x128xf32>
    %56 = arith.addf %55, %54 : vector<8x128xf32>
    %57 = arith.divf %55, %56 : vector<8x128xf32>
    %58 = math.tanh %52 : vector<8x128xf32>
    %59 = vector.extract_strided_slice %57 {offsets = [0, 0], sizes = [8, 32], strides = [1, 1]} : vector<8x128xf32> to vector<8x32xf32>
    %60 = vector.extract_strided_slice %57 {offsets = [0, 32], sizes = [8, 32], strides = [1, 1]} : vector<8x128xf32> to vector<8x32xf32>
    %61 = vector.extract_strided_slice %58 {offsets = [0, 64], sizes = [8, 32], strides = [1, 1]} : vector<8x128xf32> to vector<8x32xf32>
    %62 = vector.extract_strided_slice %57 {offsets = [0, 96], sizes = [8, 32], strides = [1, 1]} : vector<8x128xf32> to vector<8x32xf32>
    %63 = arith.mulf %60, %45 : vector<8x32xf32>
    %64 = arith.mulf %59, %61 : vector<8x32xf32>
    %65 = arith.addf %63, %64 : vector<8x32xf32>
    %66 = math.tanh %65 : vector<8x32xf32>
    %67 = arith.mulf %62, %66 : vector<8x32xf32>
    %68 = vector.extract_strided_slice %5 {offsets = [16, 0], sizes = [8, 128], strides = [1, 1]} : vector<64x128xf32> to vector<8x128xf32>
    %69 = vector.extract_strided_slice %5 {offsets = [40, 0], sizes = [8, 128], strides = [1, 1]} : vector<64x128xf32> to vector<8x128xf32>
    %70 = arith.select %25, %68, %69 : vector<8x128xi1>, vector<8x128xf32>
    %cst_16 = arith.constant dense<0.000000e+00> : vector<8x128xf32>
    %71 = tpu.matmul %67, %6, %cst_16 {dimension_numbers = #tpu.dot_dimension_numbers<[1], [0], [0], [1], [0, 0, 1, 1], [], []>} : vector<8x32xf32>, vector<32x128xf32>, vector<8x128xf32> -> vector<8x128xf32>
    %72 = arith.addf %70, %71 : vector<8x128xf32>
    %73 = arith.negf %72 : vector<8x128xf32>
    %74 = math.exp %73 : vector<8x128xf32>
    %cst_17 = arith.constant 1.000000e+00 : f32
    %75 = vector.broadcast %cst_17 : f32 to vector<8x128xf32>
    %76 = arith.addf %75, %74 : vector<8x128xf32>
    %77 = arith.divf %75, %76 : vector<8x128xf32>
    %78 = math.tanh %72 : vector<8x128xf32>
    %79 = vector.extract_strided_slice %77 {offsets = [0, 0], sizes = [8, 32], strides = [1, 1]} : vector<8x128xf32> to vector<8x32xf32>
    %80 = vector.extract_strided_slice %77 {offsets = [0, 32], sizes = [8, 32], strides = [1, 1]} : vector<8x128xf32> to vector<8x32xf32>
    %81 = vector.extract_strided_slice %78 {offsets = [0, 64], sizes = [8, 32], strides = [1, 1]} : vector<8x128xf32> to vector<8x32xf32>
    %82 = vector.extract_strided_slice %77 {offsets = [0, 96], sizes = [8, 32], strides = [1, 1]} : vector<8x128xf32> to vector<8x32xf32>
    %83 = arith.mulf %80, %65 : vector<8x32xf32>
    %84 = arith.mulf %79, %81 : vector<8x32xf32>
    %85 = arith.addf %83, %84 : vector<8x32xf32>
    %86 = math.tanh %85 : vector<8x32xf32>
    %87 = arith.mulf %82, %86 : vector<8x32xf32>
    %88 = vector.extract_strided_slice %5 {offsets = [24, 0], sizes = [8, 128], strides = [1, 1]} : vector<64x128xf32> to vector<8x128xf32>
    %89 = vector.extract_strided_slice %5 {offsets = [32, 0], sizes = [8, 128], strides = [1, 1]} : vector<64x128xf32> to vector<8x128xf32>
    %90 = arith.select %25, %88, %89 : vector<8x128xi1>, vector<8x128xf32>
    %cst_18 = arith.constant dense<0.000000e+00> : vector<8x128xf32>
    %91 = tpu.matmul %87, %6, %cst_18 {dimension_numbers = #tpu.dot_dimension_numbers<[1], [0], [0], [1], [0, 0, 1, 1], [], []>} : vector<8x32xf32>, vector<32x128xf32>, vector<8x128xf32> -> vector<8x128xf32>
    %92 = arith.addf %90, %91 : vector<8x128xf32>
    %93 = arith.negf %92 : vector<8x128xf32>
    %94 = math.exp %93 : vector<8x128xf32>
    %cst_19 = arith.constant 1.000000e+00 : f32
    %95 = vector.broadcast %cst_19 : f32 to vector<8x128xf32>
    %96 = arith.addf %95, %94 : vector<8x128xf32>
    %97 = arith.divf %95, %96 : vector<8x128xf32>
    %98 = math.tanh %92 : vector<8x128xf32>
    %99 = vector.extract_strided_slice %97 {offsets = [0, 0], sizes = [8, 32], strides = [1, 1]} : vector<8x128xf32> to vector<8x32xf32>
    %100 = vector.extract_strided_slice %97 {offsets = [0, 32], sizes = [8, 32], strides = [1, 1]} : vector<8x128xf32> to vector<8x32xf32>
    %101 = vector.extract_strided_slice %98 {offsets = [0, 64], sizes = [8, 32], strides = [1, 1]} : vector<8x128xf32> to vector<8x32xf32>
    %102 = vector.extract_strided_slice %97 {offsets = [0, 96], sizes = [8, 32], strides = [1, 1]} : vector<8x128xf32> to vector<8x32xf32>
    %103 = arith.mulf %100, %85 : vector<8x32xf32>
    %104 = arith.mulf %99, %101 : vector<8x32xf32>
    %105 = arith.addf %103, %104 : vector<8x32xf32>
    %106 = math.tanh %105 : vector<8x32xf32>
    %107 = arith.mulf %102, %106 : vector<8x32xf32>
    %108 = vector.extract_strided_slice %5 {offsets = [32, 0], sizes = [8, 128], strides = [1, 1]} : vector<64x128xf32> to vector<8x128xf32>
    %109 = vector.extract_strided_slice %5 {offsets = [24, 0], sizes = [8, 128], strides = [1, 1]} : vector<64x128xf32> to vector<8x128xf32>
    %110 = arith.select %25, %108, %109 : vector<8x128xi1>, vector<8x128xf32>
    %cst_20 = arith.constant dense<0.000000e+00> : vector<8x128xf32>
    %111 = tpu.matmul %107, %6, %cst_20 {dimension_numbers = #tpu.dot_dimension_numbers<[1], [0], [0], [1], [0, 0, 1, 1], [], []>} : vector<8x32xf32>, vector<32x128xf32>, vector<8x128xf32> -> vector<8x128xf32>
    %112 = arith.addf %110, %111 : vector<8x128xf32>
    %113 = arith.negf %112 : vector<8x128xf32>
    %114 = math.exp %113 : vector<8x128xf32>
    %cst_21 = arith.constant 1.000000e+00 : f32
    %115 = vector.broadcast %cst_21 : f32 to vector<8x128xf32>
    %116 = arith.addf %115, %114 : vector<8x128xf32>
    %117 = arith.divf %115, %116 : vector<8x128xf32>
    %118 = math.tanh %112 : vector<8x128xf32>
    %119 = vector.extract_strided_slice %117 {offsets = [0, 0], sizes = [8, 32], strides = [1, 1]} : vector<8x128xf32> to vector<8x32xf32>
    %120 = vector.extract_strided_slice %117 {offsets = [0, 32], sizes = [8, 32], strides = [1, 1]} : vector<8x128xf32> to vector<8x32xf32>
    %121 = vector.extract_strided_slice %118 {offsets = [0, 64], sizes = [8, 32], strides = [1, 1]} : vector<8x128xf32> to vector<8x32xf32>
    %122 = vector.extract_strided_slice %117 {offsets = [0, 96], sizes = [8, 32], strides = [1, 1]} : vector<8x128xf32> to vector<8x32xf32>
    %123 = arith.mulf %120, %105 : vector<8x32xf32>
    %124 = arith.mulf %119, %121 : vector<8x32xf32>
    %125 = arith.addf %123, %124 : vector<8x32xf32>
    %126 = math.tanh %125 : vector<8x32xf32>
    %127 = arith.mulf %122, %126 : vector<8x32xf32>
    %128 = vector.extract_strided_slice %5 {offsets = [40, 0], sizes = [8, 128], strides = [1, 1]} : vector<64x128xf32> to vector<8x128xf32>
    %129 = vector.extract_strided_slice %5 {offsets = [16, 0], sizes = [8, 128], strides = [1, 1]} : vector<64x128xf32> to vector<8x128xf32>
    %130 = arith.select %25, %128, %129 : vector<8x128xi1>, vector<8x128xf32>
    %cst_22 = arith.constant dense<0.000000e+00> : vector<8x128xf32>
    %131 = tpu.matmul %127, %6, %cst_22 {dimension_numbers = #tpu.dot_dimension_numbers<[1], [0], [0], [1], [0, 0, 1, 1], [], []>} : vector<8x32xf32>, vector<32x128xf32>, vector<8x128xf32> -> vector<8x128xf32>
    %132 = arith.addf %130, %131 : vector<8x128xf32>
    %133 = arith.negf %132 : vector<8x128xf32>
    %134 = math.exp %133 : vector<8x128xf32>
    %cst_23 = arith.constant 1.000000e+00 : f32
    %135 = vector.broadcast %cst_23 : f32 to vector<8x128xf32>
    %136 = arith.addf %135, %134 : vector<8x128xf32>
    %137 = arith.divf %135, %136 : vector<8x128xf32>
    %138 = math.tanh %132 : vector<8x128xf32>
    %139 = vector.extract_strided_slice %137 {offsets = [0, 0], sizes = [8, 32], strides = [1, 1]} : vector<8x128xf32> to vector<8x32xf32>
    %140 = vector.extract_strided_slice %137 {offsets = [0, 32], sizes = [8, 32], strides = [1, 1]} : vector<8x128xf32> to vector<8x32xf32>
    %141 = vector.extract_strided_slice %138 {offsets = [0, 64], sizes = [8, 32], strides = [1, 1]} : vector<8x128xf32> to vector<8x32xf32>
    %142 = vector.extract_strided_slice %137 {offsets = [0, 96], sizes = [8, 32], strides = [1, 1]} : vector<8x128xf32> to vector<8x32xf32>
    %143 = arith.mulf %140, %125 : vector<8x32xf32>
    %144 = arith.mulf %139, %141 : vector<8x32xf32>
    %145 = arith.addf %143, %144 : vector<8x32xf32>
    %146 = math.tanh %145 : vector<8x32xf32>
    %147 = arith.mulf %142, %146 : vector<8x32xf32>
    %148 = vector.extract_strided_slice %5 {offsets = [48, 0], sizes = [8, 128], strides = [1, 1]} : vector<64x128xf32> to vector<8x128xf32>
    %149 = vector.extract_strided_slice %5 {offsets = [8, 0], sizes = [8, 128], strides = [1, 1]} : vector<64x128xf32> to vector<8x128xf32>
    %150 = arith.select %25, %148, %149 : vector<8x128xi1>, vector<8x128xf32>
    %cst_24 = arith.constant dense<0.000000e+00> : vector<8x128xf32>
    %151 = tpu.matmul %147, %6, %cst_24 {dimension_numbers = #tpu.dot_dimension_numbers<[1], [0], [0], [1], [0, 0, 1, 1], [], []>} : vector<8x32xf32>, vector<32x128xf32>, vector<8x128xf32> -> vector<8x128xf32>
    %152 = arith.addf %150, %151 : vector<8x128xf32>
    %153 = arith.negf %152 : vector<8x128xf32>
    %154 = math.exp %153 : vector<8x128xf32>
    %cst_25 = arith.constant 1.000000e+00 : f32
    %155 = vector.broadcast %cst_25 : f32 to vector<8x128xf32>
    %156 = arith.addf %155, %154 : vector<8x128xf32>
    %157 = arith.divf %155, %156 : vector<8x128xf32>
    %158 = math.tanh %152 : vector<8x128xf32>
    %159 = vector.extract_strided_slice %157 {offsets = [0, 0], sizes = [8, 32], strides = [1, 1]} : vector<8x128xf32> to vector<8x32xf32>
    %160 = vector.extract_strided_slice %157 {offsets = [0, 32], sizes = [8, 32], strides = [1, 1]} : vector<8x128xf32> to vector<8x32xf32>
    %161 = vector.extract_strided_slice %158 {offsets = [0, 64], sizes = [8, 32], strides = [1, 1]} : vector<8x128xf32> to vector<8x32xf32>
    %162 = vector.extract_strided_slice %157 {offsets = [0, 96], sizes = [8, 32], strides = [1, 1]} : vector<8x128xf32> to vector<8x32xf32>
    %163 = arith.mulf %160, %145 : vector<8x32xf32>
    %164 = arith.mulf %159, %161 : vector<8x32xf32>
    %165 = arith.addf %163, %164 : vector<8x32xf32>
    %166 = math.tanh %165 : vector<8x32xf32>
    %167 = arith.mulf %162, %166 : vector<8x32xf32>
    %168 = vector.extract_strided_slice %5 {offsets = [56, 0], sizes = [8, 128], strides = [1, 1]} : vector<64x128xf32> to vector<8x128xf32>
    %169 = vector.extract_strided_slice %5 {offsets = [0, 0], sizes = [8, 128], strides = [1, 1]} : vector<64x128xf32> to vector<8x128xf32>
    %170 = arith.select %25, %168, %169 : vector<8x128xi1>, vector<8x128xf32>
    %cst_26 = arith.constant dense<0.000000e+00> : vector<8x128xf32>
    %171 = tpu.matmul %167, %6, %cst_26 {dimension_numbers = #tpu.dot_dimension_numbers<[1], [0], [0], [1], [0, 0, 1, 1], [], []>} : vector<8x32xf32>, vector<32x128xf32>, vector<8x128xf32> -> vector<8x128xf32>
    %172 = arith.addf %170, %171 : vector<8x128xf32>
    %173 = arith.negf %172 : vector<8x128xf32>
    %174 = math.exp %173 : vector<8x128xf32>
    %cst_27 = arith.constant 1.000000e+00 : f32
    %175 = vector.broadcast %cst_27 : f32 to vector<8x128xf32>
    %176 = arith.addf %175, %174 : vector<8x128xf32>
    %177 = arith.divf %175, %176 : vector<8x128xf32>
    %178 = math.tanh %172 : vector<8x128xf32>
    %179 = vector.extract_strided_slice %177 {offsets = [0, 0], sizes = [8, 32], strides = [1, 1]} : vector<8x128xf32> to vector<8x32xf32>
    %180 = vector.extract_strided_slice %177 {offsets = [0, 32], sizes = [8, 32], strides = [1, 1]} : vector<8x128xf32> to vector<8x32xf32>
    %181 = vector.extract_strided_slice %178 {offsets = [0, 64], sizes = [8, 32], strides = [1, 1]} : vector<8x128xf32> to vector<8x32xf32>
    %182 = vector.extract_strided_slice %177 {offsets = [0, 96], sizes = [8, 32], strides = [1, 1]} : vector<8x128xf32> to vector<8x32xf32>
    %183 = arith.mulf %180, %165 : vector<8x32xf32>
    %184 = arith.mulf %179, %181 : vector<8x32xf32>
    %185 = arith.addf %183, %184 : vector<8x32xf32>
    %186 = math.tanh %185 : vector<8x32xf32>
    %187 = arith.mulf %182, %186 : vector<8x32xf32>
    %c0_28 = arith.constant 0 : index
    %c0_29 = arith.constant 0 : index
    %188 = vector.load %arg4[%c0_28, %c0_29] : memref<32x128xf32, #tpu.memory_space<vmem>>, vector<32x128xf32>
    %cst_30 = arith.constant dense<0.000000e+00> : vector<8x128xf32>
    %189 = tpu.matmul %187, %188, %cst_30 {dimension_numbers = #tpu.dot_dimension_numbers<[1], [0], [0], [1], [0, 0, 1, 1], [], []>} : vector<8x32xf32>, vector<32x128xf32>, vector<8x128xf32> -> vector<8x128xf32>
    %c0_31 = arith.constant 0 : index
    %c0_32 = arith.constant 0 : index
    %190 = vector.load %arg5[%c0_31, %c0_32] : memref<1x128xf32, #tpu.memory_space<vmem>>, vector<1x128xf32>
    %191 = vector.broadcast %190 : vector<1x128xf32> to vector<8x128xf32>
    %192 = arith.addf %189, %191 : vector<8x128xf32>
    %cst_33 = arith.constant dense<0xFF800000> : vector<8xf32>
    %193 = vector.multi_reduction <maximumf>, %192, %cst_33 [1] : vector<8x128xf32> to vector<8xf32>
    %194 = vector.shape_cast %193 : vector<8xf32> to vector<8x1xf32>
    %195 = vector.broadcast %194 : vector<8x1xf32> to vector<8x128xf32>
    %196 = arith.subf %192, %195 : vector<8x128xf32>
    %197 = math.exp %196 : vector<8x128xf32>
    %cst_34 = arith.constant dense<0.000000e+00> : vector<8xf32>
    %198 = vector.multi_reduction <add>, %197, %cst_34 [1] : vector<8x128xf32> to vector<8xf32>
    %199 = vector.shape_cast %198 : vector<8xf32> to vector<8x1xf32>
    %200 = tpu.reciprocal %199 {approx = true} : vector<8x1xf32> -> vector<8x1xf32>
    %201 = vector.broadcast %200 : vector<8x1xf32> to vector<8x128xf32>
    %202 = arith.mulf %197, %201 : vector<8x128xf32>
    %c0_35 = arith.constant 0 : index
    %c0_36 = arith.constant 0 : index
    %203 = vector.load %arg6[%c0_35, %c0_36] : memref<8x128xf32, #tpu.memory_space<vmem>>, vector<8x128xf32>
    tpu.vector_store %arg6[%c0_35, %c0_36], %202 {strides = array<i32>} : memref<8x128xf32, #tpu.memory_space<vmem>>, vector<8x128xf32>,
    return
  }
}

</mosaic_0001>

<llo_original>
// kernel: tpu_custom_call.1
$region0: #{tpu_custom_call.1}
  #allocation0 [shape = 'u32[]', space=smem, size = 0x4, offset = 0x4, fixed_abs, tag = 'smem constant byte address 0x4 - core index']
  #allocation1 [shape = 'u32[72,128]{1,0:T(1,128)}', space=vmem, size = 0x9000, scoped, tag = 'internal scratch']
  %s0 = inlined_call_operand.vmem [shape: f32[64,32], index: 0, kind: input, shape index: {}]
  %s1 = inlined_call_operand.vmem [shape: f32[32,128], index: 1, kind: input, shape index: {}]
  %s2 = inlined_call_operand.vmem [shape: f32[32,128], index: 2, kind: input, shape index: {}]
  %s3 = inlined_call_operand.vmem [shape: f32[1,128], index: 3, kind: input, shape index: {}]
  %s4 = inlined_call_operand.vmem [shape: f32[32,128], index: 4, kind: input, shape index: {}]
  %s5 = inlined_call_operand.vmem [shape: f32[1,128], index: 5, kind: input, shape index: {}]
  %s6 = inlined_call_operand.hbm [shape: f32[8,128], index: 6, kind: output, shape index: {}]
  %s7 = sld [smem:[#allocation0]]
  $region34: #{tpu_custom_call.1} parent=0
    _
  %s9 = ssub.s32 1, %s7
  %s10 = scalar_select 0, %s9, %s7
  $region1: #{tpu_custom_call.1} parent=0
    #allocation2 [shape = 'u8[4096]{0}', space=vmem, size = 0x1000, scoped, tag = 'output window, operand 0, single buffered']
    #allocation3 [shape = 's32[1]{0}', space=sflag, size = 0x4, scoped, tag = 'scoped memory for tpu_custom_call.1']
    %11 = vsyncpa [#allocation3], 0
    // Predicated region
    $region2: #{tpu_custom_call.1} parent=1 // pred_check
      _
    $region3: #{tpu_custom_call.1} parent=1 // pred_check_branch
      %13 = sbr.rel (0) target = $region5
    $region4: #{tpu_custom_call.1} parent=1 // pred_region
      _
    $region5: #{tpu_custom_call.1} parent=1 // pred_fallthru
      _
    // Predicated region
    $region6: #{tpu_custom_call.1} parent=1 // pred_check
      _
    $region7: #{tpu_custom_call.1} parent=1 // pred_check_branch
      %15 = sbr.rel (0) target = $region9
    $region8: #{tpu_custom_call.1} parent=1 // pred_region
      _
    $region9: #{tpu_custom_call.1} parent=1 // pred_fallthru
      _
    // Predicated region
    $region10: #{tpu_custom_call.1} parent=1 // pred_check
      _
    $region11: #{tpu_custom_call.1} parent=1 // pred_check_branch
      %17 = sbr.rel (0) target = $region13
    $region12: #{tpu_custom_call.1} parent=1 // pred_region
      _
    $region13: #{tpu_custom_call.1} parent=1 // pred_fallthru
      _
    // Predicated region
    $region14: #{tpu_custom_call.1} parent=1 // pred_check
      _
    $region15: #{tpu_custom_call.1} parent=1 // pred_check_branch
      %19 = sbr.rel (0) target = $region17
    $region16: #{tpu_custom_call.1} parent=1 // pred_region
      _
    $region17: #{tpu_custom_call.1} parent=1 // pred_fallthru
      _
    // Predicated region
    $region18: #{tpu_custom_call.1} parent=1 // pred_check
      _
    $region19: #{tpu_custom_call.1} parent=1 // pred_check_branch
      %21 = sbr.rel (0) target = $region21
    $region20: #{tpu_custom_call.1} parent=1 // pred_region
      _
    $region21: #{tpu_custom_call.1} parent=1 // pred_fallthru
      _
    // Predicated region
    $region22: #{tpu_custom_call.1} parent=1 // pred_check
      _
    $region23: #{tpu_custom_call.1} parent=1 // pred_check_branch
      %23 = sbr.rel (0) target = $region25
    $region24: #{tpu_custom_call.1} parent=1 // pred_region
      _
    $region25: #{tpu_custom_call.1} parent=1 // pred_fallthru
      _
    %v24 = vld [vmem:[%s0] sm:$0xff]
    %v25 = vld [vmem:[%s0 + $0x8] sm:$0xff]
    %v26 = vld [vmem:[%s0 + $0x10] sm:$0xff]
    %v27 = vld [vmem:[%s0 + $0x18] sm:$0xff]
    %v28 = vld [vmem:[%s0 + $0x20] sm:$0xff]
    %v29 = vld [vmem:[%s0 + $0x28] sm:$0xff]
    %v30 = vld [vmem:[%s0 + $0x30] sm:$0xff]
    %v31 = vld [vmem:[%s0 + $0x38] sm:$0xff]
    %v32 = vld [vmem:[%s1] sm:$0xff]
    %v33 = vld [vmem:[%s1 + $0x8] sm:$0xff]
    %v34 = vld [vmem:[%s1 + $0x10] sm:$0xff]
    %v35 = vld [vmem:[%s1 + $0x18] sm:$0xff]
    %v36 = vld [vmem:[%s3] sm:$0x1]
    %v38 = vperm.slane %v36, 0
    %vm40 = vcmask 261120
    %v42 = vsel %vm40, %v24, 0
    %v45 = vsel %vm40, %v25, 0
    %v48 = vsel %vm40, %v26, 0
    %v51 = vsel %vm40, %v27, 0
    %v54 = vsel %vm40, %v28, 0
    %v57 = vsel %vm40, %v29, 0
    %v60 = vsel %vm40, %v30, 0
    %v63 = vsel %vm40, %v31, 0
    %65 = vmatpush.msra.mxu0 0.0
    %66 = vmatpush.msra.mxu0 0.0
    %67 = vmatpush.msra.mxu0 0.0
    %68 = vmatpush.msra.mxu0 0.0
    %69 = vmatpush.msra.mxu0 0.0
    %70 = vmatpush.msra.mxu0 0.0
    %71 = vmatpush.msra.mxu0 0.0
    %72 = vmatpush.msra.mxu0 0.0
    %73 = vmatpush.msra.mxu0 0.0
    %74 = vmatpush.msra.mxu0 0.0
    %75 = vmatpush.msra.mxu0 0.0
    %76 = vmatpush.msra.mxu0 0.0
    %77 = vmatpush.msra.mxu0 %v35
    %78 = vmatpush.msra.mxu0 %v34
    %79 = vmatpush.msra.mxu0 %v33
    %80 = vmatpush.msra.mxu0 %v32
    %81 = vmatmul.f32.gmra.mxu0 %v42
    %v82 = vpop.f32.mrf.mxu0
    %v83 = vadd.f32 %v38, %v82
    %84 = vmatmul.f32.gmra.mxu0 %v45
    %v85 = vpop.f32.mrf.mxu0
    %v86 = vadd.f32 %v38, %v85
    %87 = vmatmul.f32.gmra.mxu0 %v48
    %v88 = vpop.f32.mrf.mxu0
    %v89 = vadd.f32 %v38, %v88
    %90 = vmatmul.f32.gmra.mxu0 %v51
    %v91 = vpop.f32.mrf.mxu0
    %v92 = vadd.f32 %v38, %v91
    %93 = vmatmul.f32.gmra.mxu0 %v54
    %v94 = vpop.f32.mrf.mxu0
    %v95 = vadd.f32 %v38, %v94
    %96 = vmatmul.f32.gmra.mxu0 %v57
    %v97 = vpop.f32.mrf.mxu0
    %v98 = vadd.f32 %v38, %v97
    %99 = vmatmul.f32.gmra.mxu0 %v60
    %v100 = vpop.f32.mrf.mxu0
    %v101 = vadd.f32 %v38, %v100
    %102 = vmatmul.f32.gmra.mxu0 %v63
    %v103 = vpop.f32.mrf.mxu0
    %v104 = vadd.f32 %v38, %v103
    %105 = vdwg.mxu0
    %v106 = vld [vmem:[%s2] sm:$0xff]
    %v107 = vld [vmem:[%s2 + $0x8] sm:$0xff]
    %v108 = vld [vmem:[%s2 + $0x10] sm:$0xff]
    %v109 = vld [vmem:[%s2 + $0x18] sm:$0xff]
    %v110 = vlaneseq
    %v111 = vand.u32 %v110, 127
    %vm112 = vcmp.lt.s32.totalorder %v111, 0
    %v113 = vsub.s32 0, %v111
    %v114 = vsel %vm112, %v113, %v111
    %v115 = vshrl.u32 %v114, 5
    %v116 = vand.u32 %v114, 31
    %v117 = vsub.s32 0, %v116
    %v118 = vsel %vm112, %v117, %v116
    %vm119 = vcmp.ne.s32.totalorder %v118, 0
    %vm120 = vcmp.lt.s32.totalorder %v118, 0
    %vm121 = vmand %vm120, %vm119
    %v122 = vadd.s32 %v118, 32
    %v123 = vsel %vm121, %v122, %v118
    %vm124 = vcmp.lt.s32.totalorder %v123, 16
    %v125 = vsel %vm124, %v83, %v104
    %v127 = vsel %vm40, 0.0, 0
    %129 = vmatpush.msra.mxu0 0.0
    %130 = vmatpush.msra.mxu0 0.0
    %131 = vmatpush.msra.mxu0 0.0
    %132 = vmatpush.msra.mxu0 0.0
    %133 = vmatpush.msra.mxu0 0.0
    %134 = vmatpush.msra.mxu0 0.0
    %135 = vmatpush.msra.mxu0 0.0
    %136 = vmatpush.msra.mxu0 0.0
    %137 = vmatpush.msra.mxu0 0.0
    %138 = vmatpush.msra.mxu0 0.0
    %139 = vmatpush.msra.mxu0 0.0
    %140 = vmatpush.msra.mxu0 0.0
    %141 = vmatpush.msra.mxu0 %v109
    %142 = vmatpush.msra.mxu0 %v108
    %143 = vmatpush.msra.mxu0 %v107
    %144 = vmatpush.msra.mxu0 %v106
    %145 = vmatmul.f32.gmra.mxu0 %v127
    %v146 = vpop.f32.mrf.mxu0
    %v147 = vadd.f32 0.0, %v146
    %148 = vdwg.mxu0
    %v149 = vadd.f32 %v125, %v147
    %v150 = vxor.u32 %v149, 2147483648
    %v151 = vmul.f32 %v150, 1.442695
    %v152 = vpow.pop %v151
    %v153 = vadd.f32 %v152, 1.0
    %v154 = vrcp.pop %v153
    %v155 = vmul.f32 %v153, %v154
    %v156 = vsub.f32 1.0, %v155
    %v157 = vmul.f32 %v154, %v156
    %v158 = vadd.f32 %v154, %v157
    %vm159 = vweird.f32 %v153
    %vm160 = vweird.f32 %v154
    %vm161 = vmor %vm159, %vm160
    %v162 = vsel %vm161, %v154, %v158
    %v163 = vand.u32 2147483647, %v153
    %vm164 = vcmp.eq.f32.partialorder %v163, 8.507059e+37
    %v165 = vand.u32 %v153, 2147483648
    %v166 = vor.u32 1.1754944e-38, %v165
    %v167 = vsel %vm164, %v166, %v162
    %v168 = vmul.f32 1.0, %v167
    %v169 = vtanh.pop %v149
    %v170 = vmul.f32 %v168, 0.0
    %172 = vrot.lane.b32.xlu0 %v169, 64
    %v173 = vpop.permute.xlu0 %172
    %v175 = vmul.f32 %v168, %v173
    %177 = vrot.lane.b32.xlu0 %v175, 32
    %v178 = vpop.permute.xlu0 %177
    %v180 = vadd.f32 %v170, %v178
    %v181 = vtanh.pop %v180
    %183 = vrot.lane.b32.xlu0 %v181, 64
    %v184 = vpop.permute.xlu0 %183
    %v186 = vmul.f32 %v168, %v184
    %v187 = vsel %vm124, %v86, %v101
    %189 = vrot.lane.b32.xlu0 %v186, 32
    %v190 = vpop.permute.xlu0 %189
    %v191 = vsel %vm40, %v190, 0
    %193 = vmatpush.msra.mxu0 0.0
    %194 = vmatpush.msra.mxu0 0.0
    %195 = vmatpush.msra.mxu0 0.0
    %196 = vmatpush.msra.mxu0 0.0
    %197 = vmatpush.msra.mxu0 0.0
    %198 = vmatpush.msra.mxu0 0.0
    %199 = vmatpush.msra.mxu0 0.0
    %200 = vmatpush.msra.mxu0 0.0
    %201 = vmatpush.msra.mxu0 0.0
    %202 = vmatpush.msra.mxu0 0.0
    %203 = vmatpush.msra.mxu0 0.0
    %204 = vmatpush.msra.mxu0 0.0
    %205 = vmatpush.msra.mxu0 %v109
    %206 = vmatpush.msra.mxu0 %v108
    %207 = vmatpush.msra.mxu0 %v107
    %208 = vmatpush.msra.mxu0 %v106
    %209 = vmatmul.f32.gmra.mxu0 %v191
    %v210 = vpop.f32.mrf.mxu0
    %v211 = vadd.f32 0.0, %v210
    %212 = vdwg.mxu0
    %v213 = vadd.f32 %v187, %v211
    %v214 = vxor.u32 %v213, 2147483648
    %v215 = vmul.f32 %v214, 1.442695
    %v216 = vpow.pop %v215
    %v217 = vadd.f32 %v216, 1.0
    %v218 = vrcp.pop %v217
    %v219 = vmul.f32 %v217, %v218
    %v220 = vsub.f32 1.0, %v219
    %v221 = vmul.f32 %v218, %v220
    %v222 = vadd.f32 %v218, %v221
    %vm223 = vweird.f32 %v217
    %vm224 = vweird.f32 %v218
    %vm225 = vmor %vm223, %vm224
    %v226 = vsel %vm225, %v218, %v222
    %v227 = vand.u32 2147483647, %v217
    %vm228 = vcmp.eq.f32.partialorder %v227, 8.507059e+37
    %v229 = vand.u32 %v217, 2147483648
    %v230 = vor.u32 1.1754944e-38, %v229
    %v231 = vsel %vm228, %v230, %v226
    %v232 = vmul.f32 1.0, %v231
    %v233 = vtanh.pop %v213
    %v234 = vmul.f32 %v232, %v180
    %236 = vrot.lane.b32.xlu0 %v233, 64
    %v237 = vpop.permute.xlu0 %236
    %v239 = vmul.f32 %v232, %v237
    %241 = vrot.lane.b32.xlu0 %v239, 32
    %v242 = vpop.permute.xlu0 %241
    %v244 = vadd.f32 %v234, %v242
    %v245 = vtanh.pop %v244
    %247 = vrot.lane.b32.xlu0 %v245, 64
    %v248 = vpop.permute.xlu0 %247
    %v250 = vmul.f32 %v232, %v248
    %v251 = vsel %vm124, %v89, %v98
    %253 = vrot.lane.b32.xlu0 %v250, 32
    %v254 = vpop.permute.xlu0 %253
    %v255 = vsel %vm40, %v254, 0
    %257 = vmatpush.msra.mxu0 0.0
    %258 = vmatpush.msra.mxu0 0.0
    %259 = vmatpush.msra.mxu0 0.0
    %260 = vmatpush.msra.mxu0 0.0
    %261 = vmatpush.msra.mxu0 0.0
    %262 = vmatpush.msra.mxu0 0.0
    %263 = vmatpush.msra.mxu0 0.0
    %264 = vmatpush.msra.mxu0 0.0
    %265 = vmatpush.msra.mxu0 0.0
    %266 = vmatpush.msra.mxu0 0.0
    %267 = vmatpush.msra.mxu0 0.0
    %268 = vmatpush.msra.mxu0 0.0
    %269 = vmatpush.msra.mxu0 %v109
    %270 = vmatpush.msra.mxu0 %v108
    %271 = vmatpush.msra.mxu0 %v107
    %272 = vmatpush.msra.mxu0 %v106
    %273 = vmatmul.f32.gmra.mxu0 %v255
    %v274 = vpop.f32.mrf.mxu0
    %v275 = vadd.f32 0.0, %v274
    %276 = vdwg.mxu0
    %v277 = vadd.f32 %v251, %v275
    %v278 = vxor.u32 %v277, 2147483648
    %v279 = vmul.f32 %v278, 1.442695
    %v280 = vpow.pop %v279
    %v281 = vadd.f32 %v280, 1.0
    %v282 = vrcp.pop %v281
    %v283 = vmul.f32 %v281, %v282
    %v284 = vsub.f32 1.0, %v283
    %v285 = vmul.f32 %v282, %v284
    %v286 = vadd.f32 %v282, %v285
    %vm287 = vweird.f32 %v281
    %vm288 = vweird.f32 %v282
    %vm289 = vmor %vm287, %vm288
    %v290 = vsel %vm289, %v282, %v286
    %v291 = vand.u32 2147483647, %v281
    %vm292 = vcmp.eq.f32.partialorder %v291, 8.507059e+37
    %v293 = vand.u32 %v281, 2147483648
    %v294 = vor.u32 1.1754944e-38, %v293
    %v295 = vsel %vm292, %v294, %v290
    %v296 = vmul.f32 1.0, %v295
    %v297 = vtanh.pop %v277
    %v298 = vmul.f32 %v296, %v244
    %300 = vrot.lane.b32.xlu0 %v297, 64
    %v301 = vpop.permute.xlu0 %300
    %v303 = vmul.f32 %v296, %v301
    %305 = vrot.lane.b32.xlu0 %v303, 32
    %v306 = vpop.permute.xlu0 %305
    %v308 = vadd.f32 %v298, %v306
    %v309 = vtanh.pop %v308
    %311 = vrot.lane.b32.xlu0 %v309, 64
    %v312 = vpop.permute.xlu0 %311
    %v314 = vmul.f32 %v296, %v312
    %v315 = vsel %vm124, %v92, %v95
    %317 = vrot.lane.b32.xlu0 %v314, 32
    %v318 = vpop.permute.xlu0 %317
    %v319 = vsel %vm40, %v318, 0
    %321 = vmatpush.msra.mxu0 0.0
    %322 = vmatpush.msra.mxu0 0.0
    %323 = vmatpush.msra.mxu0 0.0
    %324 = vmatpush.msra.mxu0 0.0
    %325 = vmatpush.msra.mxu0 0.0
    %326 = vmatpush.msra.mxu0 0.0
    %327 = vmatpush.msra.mxu0 0.0
    %328 = vmatpush.msra.mxu0 0.0
    %329 = vmatpush.msra.mxu0 0.0
    %330 = vmatpush.msra.mxu0 0.0
    %331 = vmatpush.msra.mxu0 0.0
    %332 = vmatpush.msra.mxu0 0.0
    %333 = vmatpush.msra.mxu0 %v109
    %334 = vmatpush.msra.mxu0 %v108
    %335 = vmatpush.msra.mxu0 %v107
    %336 = vmatpush.msra.mxu0 %v106
    %337 = vmatmul.f32.gmra.mxu0 %v319
    %v338 = vpop.f32.mrf.mxu0
    %v339 = vadd.f32 0.0, %v338
    %340 = vdwg.mxu0
    %v341 = vadd.f32 %v315, %v339
    %v342 = vxor.u32 %v341, 2147483648
    %v343 = vmul.f32 %v342, 1.442695
    %v344 = vpow.pop %v343
    %v345 = vadd.f32 %v344, 1.0
    %v346 = vrcp.pop %v345
    %v347 = vmul.f32 %v345, %v346
    %v348 = vsub.f32 1.0, %v347
    %v349 = vmul.f32 %v346, %v348
    %v350 = vadd.f32 %v346, %v349
    %vm351 = vweird.f32 %v345
    %vm352 = vweird.f32 %v346
    %vm353 = vmor %vm351, %vm352
    %v354 = vsel %vm353, %v346, %v350
    %v355 = vand.u32 2147483647, %v345
    %vm356 = vcmp.eq.f32.partialorder %v355, 8.507059e+37
    %v357 = vand.u32 %v345, 2147483648
    %v358 = vor.u32 1.1754944e-38, %v357
    %v359 = vsel %vm356, %v358, %v354
    %v360 = vmul.f32 1.0, %v359
    %v361 = vtanh.pop %v341
    %v362 = vmul.f32 %v360, %v308
    %364 = vrot.lane.b32.xlu0 %v361, 64
    %v365 = vpop.permute.xlu0 %364
    %v367 = vmul.f32 %v360, %v365
    %369 = vrot.lane.b32.xlu0 %v367, 32
    %v370 = vpop.permute.xlu0 %369
    %v372 = vadd.f32 %v362, %v370
    %v373 = vtanh.pop %v372
    %375 = vrot.lane.b32.xlu0 %v373, 64
    %v376 = vpop.permute.xlu0 %375
    %v378 = vmul.f32 %v360, %v376
    %v379 = vsel %vm124, %v95, %v92
    %381 = vrot.lane.b32.xlu0 %v378, 32
    %v382 = vpop.permute.xlu0 %381
    %v383 = vsel %vm40, %v382, 0
    %385 = vmatpush.msra.mxu0 0.0
    %386 = vmatpush.msra.mxu0 0.0
    %387 = vmatpush.msra.mxu0 0.0
    %388 = vmatpush.msra.mxu0 0.0
    %389 = vmatpush.msra.mxu0 0.0
    %390 = vmatpush.msra.mxu0 0.0
    %391 = vmatpush.msra.mxu0 0.0
    %392 = vmatpush.msra.mxu0 0.0
    %393 = vmatpush.msra.mxu0 0.0
    %394 = vmatpush.msra.mxu0 0.0
    %395 = vmatpush.msra.mxu0 0.0
    %396 = vmatpush.msra.mxu0 0.0
    %397 = vmatpush.msra.mxu0 %v109
    %398 = vmatpush.msra.mxu0 %v108
    %399 = vmatpush.msra.mxu0 %v107
    %400 = vmatpush.msra.mxu0 %v106
    %401 = vmatmul.f32.gmra.mxu0 %v383
    %v402 = vpop.f32.mrf.mxu0
    %v403 = vadd.f32 0.0, %v402
    %404 = vdwg.mxu0
    %v405 = vadd.f32 %v379, %v403
    %v406 = vxor.u32 %v405, 2147483648
    %v407 = vmul.f32 %v406, 1.442695
    %v408 = vpow.pop %v407
    %v409 = vadd.f32 %v408, 1.0
    %v410 = vrcp.pop %v409
    %v411 = vmul.f32 %v409, %v410
    %v412 = vsub.f32 1.0, %v411
    %v413 = vmul.f32 %v410, %v412
    %v414 = vadd.f32 %v410, %v413
    %vm415 = vweird.f32 %v409
    %vm416 = vweird.f32 %v410
    %vm417 = vmor %vm415, %vm416
    %v418 = vsel %vm417, %v410, %v414
    %v419 = vand.u32 2147483647, %v409
    %vm420 = vcmp.eq.f32.partialorder %v419, 8.507059e+37
    %v421 = vand.u32 %v409, 2147483648
    %v422 = vor.u32 1.1754944e-38, %v421
    %v423 = vsel %vm420, %v422, %v418
    %v424 = vmul.f32 1.0, %v423
    %v425 = vtanh.pop %v405
    %v426 = vmul.f32 %v424, %v372
    %428 = vrot.lane.b32.xlu0 %v425, 64
    %v429 = vpop.permute.xlu0 %428
    %v431 = vmul.f32 %v424, %v429
    %433 = vrot.lane.b32.xlu0 %v431, 32
    %v434 = vpop.permute.xlu0 %433
    %v436 = vadd.f32 %v426, %v434
    %v437 = vtanh.pop %v436
    %439 = vrot.lane.b32.xlu0 %v437, 64
    %v440 = vpop.permute.xlu0 %439
    %v442 = vmul.f32 %v424, %v440
    %v443 = vsel %vm124, %v98, %v89
    %445 = vrot.lane.b32.xlu0 %v442, 32
    %v446 = vpop.permute.xlu0 %445
    %v447 = vsel %vm40, %v446, 0
    %449 = vmatpush.msra.mxu0 0.0
    %450 = vmatpush.msra.mxu0 0.0
    %451 = vmatpush.msra.mxu0 0.0
    %452 = vmatpush.msra.mxu0 0.0
    %453 = vmatpush.msra.mxu0 0.0
    %454 = vmatpush.msra.mxu0 0.0
    %455 = vmatpush.msra.mxu0 0.0
    %456 = vmatpush.msra.mxu0 0.0
    %457 = vmatpush.msra.mxu0 0.0
    %458 = vmatpush.msra.mxu0 0.0
    %459 = vmatpush.msra.mxu0 0.0
    %460 = vmatpush.msra.mxu0 0.0
    %461 = vmatpush.msra.mxu0 %v109
    %462 = vmatpush.msra.mxu0 %v108
    %463 = vmatpush.msra.mxu0 %v107
    %464 = vmatpush.msra.mxu0 %v106
    %465 = vmatmul.f32.gmra.mxu0 %v447
    %v466 = vpop.f32.mrf.mxu0
    %v467 = vadd.f32 0.0, %v466
    %468 = vdwg.mxu0
    %v469 = vadd.f32 %v443, %v467
    %v470 = vxor.u32 %v469, 2147483648
    %v471 = vmul.f32 %v470, 1.442695
    %v472 = vpow.pop %v471
    %v473 = vadd.f32 %v472, 1.0
    %v474 = vrcp.pop %v473
    %v475 = vmul.f32 %v473, %v474
    %v476 = vsub.f32 1.0, %v475
    %v477 = vmul.f32 %v474, %v476
    %v478 = vadd.f32 %v474, %v477
    %vm479 = vweird.f32 %v473
    %vm480 = vweird.f32 %v474
    %vm481 = vmor %vm479, %vm480
    %v482 = vsel %vm481, %v474, %v478
    %v483 = vand.u32 2147483647, %v473
    %vm484 = vcmp.eq.f32.partialorder %v483, 8.507059e+37
    %v485 = vand.u32 %v473, 2147483648
    %v486 = vor.u32 1.1754944e-38, %v485
    %v487 = vsel %vm484, %v486, %v482
    %v488 = vmul.f32 1.0, %v487
    %v489 = vtanh.pop %v469
    %v490 = vmul.f32 %v488, %v436
    %492 = vrot.lane.b32.xlu0 %v489, 64
    %v493 = vpop.permute.xlu0 %492
    %v495 = vmul.f32 %v488, %v493
    %497 = vrot.lane.b32.xlu0 %v495, 32
    %v498 = vpop.permute.xlu0 %497
    %v500 = vadd.f32 %v490, %v498
    %v501 = vtanh.pop %v500
    %503 = vrot.lane.b32.xlu0 %v501, 64
    %v504 = vpop.permute.xlu0 %503
    %v506 = vmul.f32 %v488, %v504
    %v507 = vsel %vm124, %v101, %v86
    %509 = vrot.lane.b32.xlu0 %v506, 32
    %v510 = vpop.permute.xlu0 %509
    %v511 = vsel %vm40, %v510, 0
    %513 = vmatpush.msra.mxu0 0.0
    %514 = vmatpush.msra.mxu0 0.0
    %515 = vmatpush.msra.mxu0 0.0
    %516 = vmatpush.msra.mxu0 0.0
    %517 = vmatpush.msra.mxu0 0.0
    %518 = vmatpush.msra.mxu0 0.0
    %519 = vmatpush.msra.mxu0 0.0
    %520 = vmatpush.msra.mxu0 0.0
    %521 = vmatpush.msra.mxu0 0.0
    %522 = vmatpush.msra.mxu0 0.0
    %523 = vmatpush.msra.mxu0 0.0
    %524 = vmatpush.msra.mxu0 0.0
    %525 = vmatpush.msra.mxu0 %v109
    %526 = vmatpush.msra.mxu0 %v108
    %527 = vmatpush.msra.mxu0 %v107
    %528 = vmatpush.msra.mxu0 %v106
    %529 = vmatmul.f32.gmra.mxu0 %v511
    %v530 = vpop.f32.mrf.mxu0
    %v531 = vadd.f32 0.0, %v530
    %532 = vdwg.mxu0
    %v533 = vadd.f32 %v507, %v531
    %v534 = vxor.u32 %v533, 2147483648
    %v535 = vmul.f32 %v534, 1.442695
    %v536 = vpow.pop %v535
    %v537 = vadd.f32 %v536, 1.0
    %v538 = vrcp.pop %v537
    %v539 = vmul.f32 %v537, %v538
    %v540 = vsub.f32 1.0, %v539
    %v541 = vmul.f32 %v538, %v540
    %v542 = vadd.f32 %v538, %v541
    %vm543 = vweird.f32 %v537
    %vm544 = vweird.f32 %v538
    %vm545 = vmor %vm543, %vm544
    %v546 = vsel %vm545, %v538, %v542
    %v547 = vand.u32 2147483647, %v537
    %vm548 = vcmp.eq.f32.partialorder %v547, 8.507059e+37
    %v549 = vand.u32 %v537, 2147483648
    %v550 = vor.u32 1.1754944e-38, %v549
    %v551 = vsel %vm548, %v550, %v546
    %v552 = vmul.f32 1.0, %v551
    %v553 = vtanh.pop %v533
    %v554 = vmul.f32 %v552, %v500
    %556 = vrot.lane.b32.xlu0 %v553, 64
    %v557 = vpop.permute.xlu0 %556
    %v559 = vmul.f32 %v552, %v557
    %561 = vrot.lane.b32.xlu0 %v559, 32
    %v562 = vpop.permute.xlu0 %561
    %v564 = vadd.f32 %v554, %v562
    %v565 = vtanh.pop %v564
    %567 = vrot.lane.b32.xlu0 %v565, 64
    %v568 = vpop.permute.xlu0 %567
    %v570 = vmul.f32 %v552, %v568
    %v571 = vsel %vm124, %v104, %v83
    %573 = vrot.lane.b32.xlu0 %v570, 32
    %v574 = vpop.permute.xlu0 %573
    %v575 = vsel %vm40, %v574, 0
    %577 = vmatpush.msra.mxu0 0.0
    %578 = vmatpush.msra.mxu0 0.0
    %579 = vmatpush.msra.mxu0 0.0
    %580 = vmatpush.msra.mxu0 0.0
    %581 = vmatpush.msra.mxu0 0.0
    %582 = vmatpush.msra.mxu0 0.0
    %583 = vmatpush.msra.mxu0 0.0
    %584 = vmatpush.msra.mxu0 0.0
    %585 = vmatpush.msra.mxu0 0.0
    %586 = vmatpush.msra.mxu0 0.0
    %587 = vmatpush.msra.mxu0 0.0
    %588 = vmatpush.msra.mxu0 0.0
    %589 = vmatpush.msra.mxu0 %v109
    %590 = vmatpush.msra.mxu0 %v108
    %591 = vmatpush.msra.mxu0 %v107
    %592 = vmatpush.msra.mxu0 %v106
    %593 = vmatmul.f32.gmra.mxu0 %v575
    %v594 = vpop.f32.mrf.mxu0
    %v595 = vadd.f32 0.0, %v594
    %596 = vdwg.mxu0
    %v597 = vadd.f32 %v571, %v595
    %v598 = vxor.u32 %v597, 2147483648
    %v599 = vmul.f32 %v598, 1.442695
    %v600 = vpow.pop %v599
    %v601 = vadd.f32 %v600, 1.0
    %v602 = vrcp.pop %v601
    %v603 = vmul.f32 %v601, %v602
    %v604 = vsub.f32 1.0, %v603
    %v605 = vmul.f32 %v602, %v604
    %v606 = vadd.f32 %v602, %v605
    %vm607 = vweird.f32 %v601
    %vm608 = vweird.f32 %v602
    %vm609 = vmor %vm607, %vm608
    %v610 = vsel %vm609, %v602, %v606
    %v611 = vand.u32 2147483647, %v601
    %vm612 = vcmp.eq.f32.partialorder %v611, 8.507059e+37
    %v613 = vand.u32 %v601, 2147483648
    %v614 = vor.u32 1.1754944e-38, %v613
    %v615 = vsel %vm612, %v614, %v610
    %v616 = vmul.f32 1.0, %v615
    %v617 = vtanh.pop %v597
    %v618 = vmul.f32 %v616, %v564
    %620 = vrot.lane.b32.xlu0 %v617, 64
    %v621 = vpop.permute.xlu0 %620
    %v623 = vmul.f32 %v616, %v621
    %625 = vrot.lane.b32.xlu0 %v623, 32
    %v626 = vpop.permute.xlu0 %625
    %v628 = vadd.f32 %v618, %v626
    %v629 = vtanh.pop %v628
    %631 = vrot.lane.b32.xlu0 %v629, 64
    %v632 = vpop.permute.xlu0 %631
    %v634 = vmul.f32 %v616, %v632
    %v635 = vld [vmem:[%s4] sm:$0xff]
    %v636 = vld [vmem:[%s4 + $0x8] sm:$0xff]
    %v637 = vld [vmem:[%s4 + $0x10] sm:$0xff]
    %v638 = vld [vmem:[%s4 + $0x18] sm:$0xff]
    %v639 = vld [vmem:[%s5] sm:$0x1]
    %v641 = vperm.slane %v639, 0
    %644 = vrot.lane.b32.xlu0 %v634, 32
    %v645 = vpop.permute.xlu0 %644
    %v646 = vsel %vm40, %v645, 0
    %648 = vmatpush.msra.mxu0 0.0
    %649 = vmatpush.msra.mxu0 0.0
    %650 = vmatpush.msra.mxu0 0.0
    %651 = vmatpush.msra.mxu0 0.0
    %652 = vmatpush.msra.mxu0 0.0
    %653 = vmatpush.msra.mxu0 0.0
    %654 = vmatpush.msra.mxu0 0.0
    %655 = vmatpush.msra.mxu0 0.0
    %656 = vmatpush.msra.mxu0 0.0
    %657 = vmatpush.msra.mxu0 0.0
    %658 = vmatpush.msra.mxu0 0.0
    %659 = vmatpush.msra.mxu0 0.0
    %660 = vmatpush.msra.mxu0 %v638
    %661 = vmatpush.msra.mxu0 %v637
    %662 = vmatpush.msra.mxu0 %v636
    %663 = vmatpush.msra.mxu0 %v635
    %664 = vmatmul.f32.gmra.mxu0 %v646
    %v665 = vpop.f32.mrf.mxu0
    %v666 = vadd.f32 %v641, %v665
    %667 = vdwg.mxu0
    %668 = vmax.xlane.f32.xlu0 %v666
    %v669 = vpop.xlane.xlu0 %668
    %v670 = vsub.f32 %v666, %v669
    %v671 = vmul.f32 %v670, 1.442695
    %v672 = vpow.pop %v671
    %673 = vadd.xlane.f32.xlu0 %v672
    %v674 = vpop.xlane.xlu0 %673
    %v675 = vrcp.pop %v674
    %v676 = vmul.f32 %v672, %v675
    %677 = vst [vmem:[#allocation2] sm:$0xff] %v676
    // Predicated region
    $region26: #{tpu_custom_call.1} parent=1 // pred_check
      _
    $region27: #{tpu_custom_call.1} parent=1 // pred_check_branch
      %679 = sbr.rel (0) target = $region29
    $region28: #{tpu_custom_call.1} parent=1 // pred_region
      %681 = vsyncadd [#allocation3], 0
      %s683 = sshll.u32 [#allocation2], 4
      %s684 = int_to_ptr.vmem [resolvable:$true] %s683
      %s685 = sshll.u32 %s6, 4
      %s686 = int_to_ptr.hbm [resolvable:$true] %s685
      %688 = dma.vmem_to_hbm [thread:$0]  %s684, 128, %s686, [#allocation3]
    $region29: #{tpu_custom_call.1} parent=1 // pred_fallthru
      _
    // Predicated region
    $region30: #{tpu_custom_call.1} parent=1 // pred_check
      _
    $region31: #{tpu_custom_call.1} parent=1 // pred_check_branch
      %690 = sbr.rel (0) target = $region33
    $region32: #{tpu_custom_call.1} parent=1 // pred_region
      %692 = dma.done [#allocation3], 128
    $region33: #{tpu_custom_call.1} parent=1 // pred_fallthru
      _
    %693 = vsyncpa [#allocation3], 1

</llo_original>
